<compile_context>
chip_gen: v6e
topology: v6e:2x2x1
jax: 0.10.0
libtpu: 0.0.40
codegen_flags: <defaults>
</compile_context>

<pallas_src>
import functools

import jax
import jax.numpy as jnp
from jax.experimental import pallas as pl
from jax.experimental.pallas import tpu as pltpu


def _make_jsd_kernel(valid_rows, block_rows):
    """valid_rows: real batch size (None if no padding). block_rows: TB (static)."""

    def kernel(x_ref, y_ref, o_ref):
        step = pl.program_id(0)

        x = x_ref[...].astype(jnp.float32)
        y = y_ref[...].astype(jnp.float32)

        def softmax_pair(z):
            m = jnp.max(z, axis=1, keepdims=True)
            s = z - m
            e = jnp.exp(s)                              # the only exp per element
            sum_e = jnp.sum(e, axis=1, keepdims=True)
            lp = s - jnp.log(sum_e)                     # log_softmax
            p = e * (1.0 / sum_e)                       # softmax (reuses e)
            return p, lp

        p1, lp1 = softmax_pair(x)
        p2, lp2 = softmax_pair(y)

        avg = (p1 + p2) * 0.5
        # Note: like the PyTorch module, log(avg) is -inf if a probability
        # underflows to 0 under extreme logits (same hazard as the reference).
        log_avg = jnp.log(avg)

        # Fused KL(m||p1) + KL(m||p2) pointwise term -> ONE cross-lane reduction.
        contrib = avg * (2.0 * log_avg - lp1 - lp2)

        if valid_rows is not None:
            row = jax.lax.broadcasted_iota(jnp.int32, (block_rows, 1), 0)
            row = row + step * block_rows
            contrib = jnp.where(row < valid_rows, contrib, 0.0)

        partial = jnp.sum(contrib)
        # Lane-dense (8,128) partial-sum block -> unmasked vector store; each
        # grid step owns a distinct output block, so the axis can be parallel.
        o_ref[...] = jnp.full((1, 8, 128), partial, dtype=jnp.float32)

    return kernel


@functools.partial(jax.jit, static_argnames=("block_rows",))
def js_divergence(net1_logits, net2_logits, block_rows=None):
    """JS divergence (scalar f32) between softmax(net1_logits) and softmax(net2_logits)."""
    assert net1_logits.shape == net2_logits.shape
    assert net1_logits.ndim == 2
    B, C = net1_logits.shape

    if block_rows is None:
        # ~1 MiB f32 working tile: double-buffered inputs + elementwise
        # temporaries stay well under scoped VMEM on v5e (16 MiB default),
        # v6e (32 MiB) and v7x (64 MiB physical).
        tb = (1 << 20) // (C * 4)
        tb = max(8, min(1024, (tb // 8) * 8))
    else:
        tb = max(8, (int(block_rows) + 7) // 8 * 8)   # sublane-aligned
    b_aligned = (B + 7) // 8 * 8
    tb = min(tb, b_aligned)

    b_pad = (B + tb - 1) // tb * tb
    if b_pad != B:
        pad = ((0, b_pad - B), (0, 0))
        net1_logits = jnp.pad(net1_logits, pad)   # zero rows, masked in-kernel
        net2_logits = jnp.pad(net2_logits, pad)
    num_tiles = b_pad // tb
    valid_rows = B if b_pad != B else None

    kernel = _make_jsd_kernel(valid_rows, tb)

    partials = pl.pallas_call(
        kernel,
        out_shape=jax.ShapeDtypeStruct((num_tiles, 8, 128), jnp.float32),
        grid_spec=pltpu.PrefetchScalarGridSpec(
            num_scalar_prefetch=0,
            grid=(num_tiles,),
            in_specs=[
                pl.BlockSpec((tb, C), lambda i: (i, 0)),
                pl.BlockSpec((tb, C), lambda i: (i, 0)),
            ],
            out_specs=pl.BlockSpec((1, 8, 128), lambda i: (i, 0, 0)),
        ),
        compiler_params=pltpu.CompilerParams(
            dimension_semantics=("parallel",),       # independent per-tile partials
            vmem_limit_bytes=32 * 1024 * 1024,
        ),
    )(net1_logits, net2_logits)

    total = jnp.sum(partials[:, 0, 0])
    # 'batchmean' divides by the ORIGINAL dim-0 size; 0.5 averages the two KLs.
    return total * 0.5 / jnp.float32(B)


def _reference_jsd(x, y):
    # Pure-JAX reference mirroring the PyTorch module, for a sanity check.
    p1 = jax.nn.softmax(x, axis=1)
    p2 = jax.nn.softmax(y, axis=1)
    avg = (p1 + p2) / 2.0
    lp1 = jax.nn.log_softmax(x, axis=1)
    lp2 = jax.nn.log_softmax(y, axis=1)
    b = x.shape[0]
    kl1 = jnp.sum(avg * (jnp.log(avg) - lp1)) / b
    kl2 = jnp.sum(avg * (jnp.log(avg) - lp2)) / b
    return (kl1 + kl2) / 2.0


if __name__ == "__main__":
    key = jax.random.PRNGKey(0)
    k1, k2 = jax.random.split(key)
    B, C = 20, 384  # small classification-style logits (B not a multiple of 8)
    net1_logits = jax.random.normal(k1, (B, C), dtype=jnp.float32)
    net2_logits = jax.random.normal(k2, (B, C), dtype=jnp.float32)

    ref = _reference_jsd(net1_logits, net2_logits)

    # Auto-sized tile path (single tile here).
    jsd_auto = jax.block_until_ready(js_divergence(net1_logits, net2_logits))
    # Forced small tile: exercises multi-step grid, padding + masking.
    jsd_tiled = jax.block_until_ready(
        js_divergence(net1_logits, net2_logits, block_rows=8))

    assert jnp.allclose(jsd_auto, ref, rtol=1e-4, atol=1e-5), (jsd_auto, ref)
    assert jnp.allclose(jsd_tiled, ref, rtol=1e-4, atol=1e-5), (jsd_tiled, ref)

    print("KERNEL_OK")
</pallas_src>

<mosaic_0001>
module attributes {stable_mosaic.version = 11 : i64} {
  func.func @kernel(%arg0: i32, %arg1: memref<24x384xf32, #tpu.memory_space<vmem>>, %arg2: memref<24x384xf32, #tpu.memory_space<vmem>>, %arg3: memref<1x8x128xf32, #tpu.memory_space<vmem>>) attributes {dimension_semantics = [#tpu.dimension_semantics<parallel>], iteration_bounds = array<i64: 1>, scalar_prefetch = 0 : i64, scratch_operands = 0 : i64, tpu.core_type = #tpu.core_type<tc>, window_params = [{transform_indices = @transform_0, window_bounds = array<i64: 24, 384>}, {transform_indices = @transform_1, window_bounds = array<i64: 24, 384>}, {transform_indices = @transform_2, window_bounds = array<i64: 1, 8, 128>}]} {
    %c0 = arith.constant 0 : index
    %c0_0 = arith.constant 0 : index
    %0 = vector.load %arg1[%c0, %c0_0] : memref<24x384xf32, #tpu.memory_space<vmem>>, vector<24x384xf32>
    %c0_1 = arith.constant 0 : index
    %c0_2 = arith.constant 0 : index
    %1 = vector.load %arg2[%c0_1, %c0_2] : memref<24x384xf32, #tpu.memory_space<vmem>>, vector<24x384xf32>
    %cst = arith.constant dense<0xFF800000> : vector<24xf32>
    %2 = vector.multi_reduction <maximumf>, %0, %cst [1] : vector<24x384xf32> to vector<24xf32>
    %3 = vector.shape_cast %2 : vector<24xf32> to vector<24x1xf32>
    %4 = vector.broadcast %3 : vector<24x1xf32> to vector<24x384xf32>
    %5 = arith.subf %0, %4 : vector<24x384xf32>
    %6 = math.exp %5 : vector<24x384xf32>
    %cst_3 = arith.constant dense<0.000000e+00> : vector<24xf32>
    %7 = vector.multi_reduction <add>, %6, %cst_3 [1] : vector<24x384xf32> to vector<24xf32>
    %8 = vector.shape_cast %7 : vector<24xf32> to vector<24x1xf32>
    %9 = math.log %8 : vector<24x1xf32>
    %10 = vector.broadcast %9 : vector<24x1xf32> to vector<24x384xf32>
    %11 = arith.subf %5, %10 : vector<24x384xf32>
    %cst_4 = arith.constant 1.000000e+00 : f32
    %12 = vector.broadcast %cst_4 : f32 to vector<24x1xf32>
    %13 = arith.divf %12, %8 : vector<24x1xf32>
    %14 = vector.broadcast %13 : vector<24x1xf32> to vector<24x384xf32>
    %15 = arith.mulf %6, %14 : vector<24x384xf32>
    %cst_5 = arith.constant dense<0xFF800000> : vector<24xf32>
    %16 = vector.multi_reduction <maximumf>, %1, %cst_5 [1] : vector<24x384xf32> to vector<24xf32>
    %17 = vector.shape_cast %16 : vector<24xf32> to vector<24x1xf32>
    %18 = vector.broadcast %17 : vector<24x1xf32> to vector<24x384xf32>
    %19 = arith.subf %1, %18 : vector<24x384xf32>
    %20 = math.exp %19 : vector<24x384xf32>
    %cst_6 = arith.constant dense<0.000000e+00> : vector<24xf32>
    %21 = vector.multi_reduction <add>, %20, %cst_6 [1] : vector<24x384xf32> to vector<24xf32>
    %22 = vector.shape_cast %21 : vector<24xf32> to vector<24x1xf32>
    %23 = math.log %22 : vector<24x1xf32>
    %24 = vector.broadcast %23 : vector<24x1xf32> to vector<24x384xf32>
    %25 = arith.subf %19, %24 : vector<24x384xf32>
    %cst_7 = arith.constant 1.000000e+00 : f32
    %26 = vector.broadcast %cst_7 : f32 to vector<24x1xf32>
    %27 = arith.divf %26, %22 : vector<24x1xf32>
    %28 = vector.broadcast %27 : vector<24x1xf32> to vector<24x384xf32>
    %29 = arith.mulf %20, %28 : vector<24x384xf32>
    %30 = arith.addf %15, %29 : vector<24x384xf32>
    %cst_8 = arith.constant 5.000000e-01 : f32
    %31 = vector.broadcast %cst_8 : f32 to vector<24x384xf32>
    %32 = arith.mulf %30, %31 : vector<24x384xf32>
    %33 = math.log %32 : vector<24x384xf32>
    %cst_9 = arith.constant 2.000000e+00 : f32
    %34 = vector.broadcast %cst_9 : f32 to vector<24x384xf32>
    %35 = arith.mulf %34, %33 : vector<24x384xf32>
    %36 = arith.subf %35, %11 : vector<24x384xf32>
    %37 = arith.subf %36, %25 : vector<24x384xf32>
    %38 = arith.mulf %32, %37 : vector<24x384xf32>
    %39 = tpu.iota {dimensions = array<i32: 0>} : vector<24x1xi32>
    %c24_i32 = arith.constant 24 : i32
    %40 = arith.muli %arg0, %c24_i32 : i32
    %41 = vector.broadcast %40 : i32 to vector<24x1xi32>
    %42 = arith.addi %39, %41 : vector<24x1xi32>
    %c20_i32 = arith.constant 20 : i32
    %43 = vector.broadcast %c20_i32 : i32 to vector<24x1xi32>
    %44 = arith.cmpi slt, %42, %43 : vector<24x1xi32>
    %cst_10 = arith.constant 0.000000e+00 : f32
    %45 = vector.shape_cast %44 : vector<24x1xi1> to vector<24x1xi1>
    %46 = vector.broadcast %45 : vector<24x1xi1> to vector<24x384xi1>
    %47 = vector.broadcast %cst_10 : f32 to vector<24x384xf32>
    %48 = arith.select %46, %38, %47 : vector<24x384xi1>, vector<24x384xf32>
    %49 = vector.shape_cast %48 : vector<24x384xf32> to vector<1x24x384xf32>
    %cst_11 = arith.constant dense<0.000000e+00> : vector<1xf32>
    %50 = vector.multi_reduction <add>, %49, %cst_11 [1, 2] : vector<1x24x384xf32> to vector<1xf32>
    %51 = vector.shape_cast %50 : vector<1xf32> to vector<1x1x1xf32>
    %52 = vector.extract %51[0, 0, 0] : f32 from vector<1x1x1xf32>
    %53 = vector.broadcast %52 : f32 to vector<1x8x128xf32>
    %c0_12 = arith.constant 0 : index
    %c0_13 = arith.constant 0 : index
    %c0_14 = arith.constant 0 : index
    %54 = vector.load %arg3[%c0_12, %c0_13, %c0_14] : memref<1x8x128xf32, #tpu.memory_space<vmem>>, vector<1x8x128xf32>
    tpu.vector_store %arg3[%c0_12, %c0_13, %c0_14], %53 {strides = array<i32>} : memref<1x8x128xf32, #tpu.memory_space<vmem>>, vector<1x8x128xf32>,
    return
  }
  func.func @transform_0(%arg0: i32) -> (i32, i32) {
    %c0_i32 = arith.constant 0 : i32
    %c0_i32_0 = arith.constant 0 : i32
    return %arg0, %c0_i32 : i32, i32
  }
  func.func @transform_1(%arg0: i32) -> (i32, i32) {
    %c0_i32 = arith.constant 0 : i32
    %c0_i32_0 = arith.constant 0 : i32
    return %arg0, %c0_i32 : i32, i32
  }
  func.func @transform_2(%arg0: i32) -> (i32, i32, i32) {
    %c0_i32 = arith.constant 0 : i32
    %c0_i32_0 = arith.constant 0 : i32
    %c0_i32_1 = arith.constant 0 : i32
    return %arg0, %c0_i32, %c0_i32_0 : i32, i32, i32
  }
}

</mosaic_0001>

<llo_original>
// kernel: js_divergence.1
$region0: #{js_divergence.1}
  #allocation0 [shape = 'u32[]', space=smem, size = 0x4, offset = 0x4, fixed_abs, tag = 'smem constant byte address 0x4 - core index']
  #allocation1 [shape = 'u32[144,128]{1,0:T(1,128)}', space=vmem, size = 0x12000, scoped, tag = 'internal scratch']
  %s0 = inlined_call_operand.vmem [shape: f32[24,384], index: 0, kind: input, shape index: {}]
  %s1 = inlined_call_operand.vmem [shape: f32[24,384], index: 1, kind: input, shape index: {}]
  %s2 = inlined_call_operand.vmem [shape: f32[1,8,128], index: 2, kind: output, shape index: {}]
  %s3 = sld [smem:[#allocation0]]
  $region18: #{js_divergence.1} parent=0
    _
  %s5 = ssub.s32 1, %s3
  %s6 = scalar_select 0, %s5, %s3
  // Predicated region
  $region2: #{js_divergence.1} parent=0 // pred_check
    _
  $region3: #{js_divergence.1} parent=0 // pred_check_branch
    %8 = sbr.rel (0) target = $region5
  $region4: #{js_divergence.1} parent=0 // pred_region
    _
  $region5: #{js_divergence.1} parent=0 // pred_fallthru
    _
  // Predicated region
  $region6: #{js_divergence.1} parent=0 // pred_check
    _
  $region7: #{js_divergence.1} parent=0 // pred_check_branch
    %10 = sbr.rel (0) target = $region9
  $region8: #{js_divergence.1} parent=0 // pred_region
    _
  $region9: #{js_divergence.1} parent=0 // pred_fallthru
    _
  %v11 = vld [vmem:[%s0] sm:$0xff]
  %v12 = vld [vmem:[%s0 + $0x8] sm:$0xff]
  %v13 = vld [vmem:[%s0 + $0x10] sm:$0xff]
  %v14 = vld [vmem:[%s0 + $0x18] sm:$0xff]
  %v15 = vld [vmem:[%s0 + $0x20] sm:$0xff]
  %v16 = vld [vmem:[%s0 + $0x28] sm:$0xff]
  %v17 = vld [vmem:[%s0 + $0x30] sm:$0xff]
  %v18 = vld [vmem:[%s0 + $0x38] sm:$0xff]
  %v19 = vld [vmem:[%s0 + $0x40] sm:$0xff]
  %v20 = vld [vmem:[%s1] sm:$0xff]
  %v21 = vld [vmem:[%s1 + $0x8] sm:$0xff]
  %v22 = vld [vmem:[%s1 + $0x10] sm:$0xff]
  %v23 = vld [vmem:[%s1 + $0x18] sm:$0xff]
  %v24 = vld [vmem:[%s1 + $0x20] sm:$0xff]
  %v25 = vld [vmem:[%s1 + $0x28] sm:$0xff]
  %v26 = vld [vmem:[%s1 + $0x30] sm:$0xff]
  %v27 = vld [vmem:[%s1 + $0x38] sm:$0xff]
  %v28 = vld [vmem:[%s1 + $0x40] sm:$0xff]
  %v29 = vmax.f32 %v11, %v13
  %v30 = vmax.f32 %v29, %v12
  %31 = vmax.xlane.f32.xlu0 %v30
  %v32 = vpop.xlane.xlu0 %31
  %v33 = vmax.f32 %v14, %v16
  %v34 = vmax.f32 %v33, %v15
  %35 = vmax.xlane.f32.xlu0 %v34
  %v36 = vpop.xlane.xlu0 %35
  %v37 = vmax.f32 %v17, %v19
  %v38 = vmax.f32 %v37, %v18
  %39 = vmax.xlane.f32.xlu0 %v38
  %v40 = vpop.xlane.xlu0 %39
  %v41 = vsub.f32 %v11, %v32
  %v42 = vsub.f32 %v12, %v32
  %v43 = vsub.f32 %v13, %v32
  %v44 = vsub.f32 %v14, %v36
  %v45 = vsub.f32 %v15, %v36
  %v46 = vsub.f32 %v16, %v36
  %v47 = vsub.f32 %v17, %v40
  %v48 = vsub.f32 %v18, %v40
  %v49 = vsub.f32 %v19, %v40
  %v50 = vmul.f32 %v41, 1.442695
  %v51 = vpow.pop %v50
  %v52 = vmul.f32 %v42, 1.442695
  %v53 = vpow.pop %v52
  %v54 = vmul.f32 %v43, 1.442695
  %v55 = vpow.pop %v54
  %v56 = vmul.f32 %v44, 1.442695
  %v57 = vpow.pop %v56
  %v58 = vmul.f32 %v45, 1.442695
  %v59 = vpow.pop %v58
  %v60 = vmul.f32 %v46, 1.442695
  %v61 = vpow.pop %v60
  %v62 = vmul.f32 %v47, 1.442695
  %v63 = vpow.pop %v62
  %v64 = vmul.f32 %v48, 1.442695
  %v65 = vpow.pop %v64
  %v66 = vmul.f32 %v49, 1.442695
  %v67 = vpow.pop %v66
  %v68 = vadd.f32 %v51, %v53
  %v69 = vadd.f32 %v68, %v55
  %70 = vadd.xlane.f32.xlu0 %v69
  %v71 = vpop.xlane.xlu0 %70
  %v72 = vadd.f32 %v57, %v59
  %v73 = vadd.f32 %v72, %v61
  %74 = vadd.xlane.f32.xlu0 %v73
  %v75 = vpop.xlane.xlu0 %74
  %v76 = vadd.f32 %v63, %v65
  %v77 = vadd.f32 %v76, %v67
  %78 = vadd.xlane.f32.xlu0 %v77
  %v79 = vpop.xlane.xlu0 %78
  %v80 = vlog2.pop %v71
  %v81 = vmul.f32 %v80, 0.6931472
  %v82 = vlog2.pop %v75
  %v83 = vmul.f32 %v82, 0.6931472
  %v84 = vlog2.pop %v79
  %v85 = vmul.f32 %v84, 0.6931472
  %v86 = vsub.f32 %v41, %v81
  %v87 = vsub.f32 %v42, %v81
  %v88 = vsub.f32 %v43, %v81
  %v89 = vsub.f32 %v44, %v83
  %v90 = vsub.f32 %v45, %v83
  %v91 = vsub.f32 %v46, %v83
  %v92 = vsub.f32 %v47, %v85
  %v93 = vsub.f32 %v48, %v85
  %v94 = vsub.f32 %v49, %v85
  %v95 = vrcp.pop %v71
  %v96 = vmul.f32 1.0, %v95
  %v97 = vrcp.pop %v75
  %v98 = vmul.f32 1.0, %v97
  %v99 = vrcp.pop %v79
  %v100 = vmul.f32 1.0, %v99
  %v101 = vmul.f32 %v51, %v96
  %v102 = vmul.f32 %v53, %v96
  %v103 = vmul.f32 %v55, %v96
  %v104 = vmul.f32 %v57, %v98
  %v105 = vmul.f32 %v59, %v98
  %v106 = vmul.f32 %v61, %v98
  %v107 = vmul.f32 %v63, %v100
  %v108 = vmul.f32 %v65, %v100
  %v109 = vmul.f32 %v67, %v100
  %v110 = vmax.f32 %v20, %v22
  %v111 = vmax.f32 %v110, %v21
  %112 = vmax.xlane.f32.xlu0 %v111
  %v113 = vpop.xlane.xlu0 %112
  %v114 = vmax.f32 %v23, %v25
  %v115 = vmax.f32 %v114, %v24
  %116 = vmax.xlane.f32.xlu0 %v115
  %v117 = vpop.xlane.xlu0 %116
  %v118 = vmax.f32 %v26, %v28
  %v119 = vmax.f32 %v118, %v27
  %120 = vmax.xlane.f32.xlu0 %v119
  %v121 = vpop.xlane.xlu0 %120
  %v122 = vsub.f32 %v20, %v113
  %v123 = vsub.f32 %v21, %v113
  %v124 = vsub.f32 %v22, %v113
  %v125 = vsub.f32 %v23, %v117
  %v126 = vsub.f32 %v24, %v117
  %v127 = vsub.f32 %v25, %v117
  %v128 = vsub.f32 %v26, %v121
  %v129 = vsub.f32 %v27, %v121
  %v130 = vsub.f32 %v28, %v121
  %v131 = vmul.f32 %v122, 1.442695
  %v132 = vpow.pop %v131
  %v133 = vmul.f32 %v123, 1.442695
  %v134 = vpow.pop %v133
  %v135 = vmul.f32 %v124, 1.442695
  %v136 = vpow.pop %v135
  %v137 = vmul.f32 %v125, 1.442695
  %v138 = vpow.pop %v137
  %v139 = vmul.f32 %v126, 1.442695
  %v140 = vpow.pop %v139
  %v141 = vmul.f32 %v127, 1.442695
  %v142 = vpow.pop %v141
  %v143 = vmul.f32 %v128, 1.442695
  %v144 = vpow.pop %v143
  %v145 = vmul.f32 %v129, 1.442695
  %v146 = vpow.pop %v145
  %v147 = vmul.f32 %v130, 1.442695
  %v148 = vpow.pop %v147
  %v149 = vadd.f32 %v132, %v134
  %v150 = vadd.f32 %v149, %v136
  %151 = vadd.xlane.f32.xlu0 %v150
  %v152 = vpop.xlane.xlu0 %151
  %v153 = vadd.f32 %v138, %v140
  %v154 = vadd.f32 %v153, %v142
  %155 = vadd.xlane.f32.xlu0 %v154
  %v156 = vpop.xlane.xlu0 %155
  %v157 = vadd.f32 %v144, %v146
  %v158 = vadd.f32 %v157, %v148
  %159 = vadd.xlane.f32.xlu0 %v158
  %v160 = vpop.xlane.xlu0 %159
  %v161 = vlog2.pop %v152
  %v162 = vmul.f32 %v161, 0.6931472
  %v163 = vlog2.pop %v156
  %v164 = vmul.f32 %v163, 0.6931472
  %v165 = vlog2.pop %v160
  %v166 = vmul.f32 %v165, 0.6931472
  %v167 = vsub.f32 %v122, %v162
  %v168 = vsub.f32 %v123, %v162
  %v169 = vsub.f32 %v124, %v162
  %v170 = vsub.f32 %v125, %v164
  %v171 = vsub.f32 %v126, %v164
  %v172 = vsub.f32 %v127, %v164
  %v173 = vsub.f32 %v128, %v166
  %v174 = vsub.f32 %v129, %v166
  %v175 = vsub.f32 %v130, %v166
  %v176 = vrcp.pop %v152
  %v177 = vmul.f32 1.0, %v176
  %v178 = vrcp.pop %v156
  %v179 = vmul.f32 1.0, %v178
  %v180 = vrcp.pop %v160
  %v181 = vmul.f32 1.0, %v180
  %v182 = vmul.f32 %v132, %v177
  %v183 = vmul.f32 %v134, %v177
  %v184 = vmul.f32 %v136, %v177
  %v185 = vmul.f32 %v138, %v179
  %v186 = vmul.f32 %v140, %v179
  %v187 = vmul.f32 %v142, %v179
  %v188 = vmul.f32 %v144, %v181
  %v189 = vmul.f32 %v146, %v181
  %v190 = vmul.f32 %v148, %v181
  %v191 = vadd.f32 %v101, %v182
  %v192 = vadd.f32 %v102, %v183
  %v193 = vadd.f32 %v103, %v184
  %v194 = vadd.f32 %v104, %v185
  %v195 = vadd.f32 %v105, %v186
  %v196 = vadd.f32 %v106, %v187
  %v197 = vadd.f32 %v107, %v188
  %v198 = vadd.f32 %v108, %v189
  %v199 = vadd.f32 %v109, %v190
  %v200 = vmul.f32 %v191, 0.5
  %v201 = vmul.f32 %v192, 0.5
  %v202 = vmul.f32 %v193, 0.5
  %v203 = vmul.f32 %v194, 0.5
  %v204 = vmul.f32 %v195, 0.5
  %v205 = vmul.f32 %v196, 0.5
  %v206 = vmul.f32 %v197, 0.5
  %v207 = vmul.f32 %v198, 0.5
  %v208 = vmul.f32 %v199, 0.5
  %v209 = vlog2.pop %v200
  %v210 = vmul.f32 %v209, 0.6931472
  %v211 = vlog2.pop %v201
  %v212 = vmul.f32 %v211, 0.6931472
  %v213 = vlog2.pop %v202
  %v214 = vmul.f32 %v213, 0.6931472
  %v215 = vlog2.pop %v203
  %v216 = vmul.f32 %v215, 0.6931472
  %v217 = vlog2.pop %v204
  %v218 = vmul.f32 %v217, 0.6931472
  %v219 = vlog2.pop %v205
  %v220 = vmul.f32 %v219, 0.6931472
  %v221 = vlog2.pop %v206
  %v222 = vmul.f32 %v221, 0.6931472
  %v223 = vlog2.pop %v207
  %v224 = vmul.f32 %v223, 0.6931472
  %v225 = vlog2.pop %v208
  %v226 = vmul.f32 %v225, 0.6931472
  %v227 = vmul.f32 %v210, 2.0
  %v228 = vmul.f32 %v212, 2.0
  %v229 = vmul.f32 %v214, 2.0
  %v230 = vmul.f32 %v216, 2.0
  %v231 = vmul.f32 %v218, 2.0
  %v232 = vmul.f32 %v220, 2.0
  %v233 = vmul.f32 %v222, 2.0
  %v234 = vmul.f32 %v224, 2.0
  %v235 = vmul.f32 %v226, 2.0
  %v236 = vsub.f32 %v227, %v86
  %v237 = vsub.f32 %v228, %v87
  %v238 = vsub.f32 %v229, %v88
  %v239 = vsub.f32 %v230, %v89
  %v240 = vsub.f32 %v231, %v90
  %v241 = vsub.f32 %v232, %v91
  %v242 = vsub.f32 %v233, %v92
  %v243 = vsub.f32 %v234, %v93
  %v244 = vsub.f32 %v235, %v94
  %v245 = vsub.f32 %v236, %v167
  %v246 = vsub.f32 %v237, %v168
  %v247 = vsub.f32 %v238, %v169
  %v248 = vsub.f32 %v239, %v170
  %v249 = vsub.f32 %v240, %v171
  %v250 = vsub.f32 %v241, %v172
  %v251 = vsub.f32 %v242, %v173
  %v252 = vsub.f32 %v243, %v174
  %v253 = vsub.f32 %v244, %v175
  %v254 = vmul.f32 %v200, %v245
  %v255 = vmul.f32 %v201, %v246
  %v256 = vmul.f32 %v202, %v247
  %v257 = vmul.f32 %v203, %v248
  %v258 = vmul.f32 %v204, %v249
  %v259 = vmul.f32 %v205, %v250
  %v260 = vmul.f32 %v206, %v251
  %v261 = vmul.f32 %v207, %v252
  %v262 = vmul.f32 %v208, %v253
  %v263 = vlaneseq
  %v264 = vshrl.u32 %v263, 7
  %v265 = vadd.s32 %v264, 8
  %v266 = vadd.s32 %v264, 16
  %s267 = smul.u32 0, 24
  %v268 = vstv %s267
  %v269 = vadd.s32 %v264, %v268
  %v270 = vadd.s32 %v265, %v268
  %v271 = vadd.s32 %v266, %v268
  %vm272 = vcmp.lt.s32.totalorder %v269, 20
  %vm273 = vcmp.lt.s32.totalorder %v270, 20
  %vm274 = vcmp.lt.s32.totalorder %v271, 20
  %v275 = vsel %vm272, 1, 0
  %v276 = vsel %vm273, 1, 0
  %v277 = vsel %vm274, 1, 0
  %vm278 = vcmp.eq.s32.totalorder %v275, 1
  %vm279 = vcmp.eq.s32.totalorder %v276, 1
  %vm280 = vcmp.eq.s32.totalorder %v277, 1
  %v281 = vsel %vm278, %v254, 0.0
  %v282 = vsel %vm278, %v255, 0.0
  %v283 = vsel %vm278, %v256, 0.0
  %v284 = vsel %vm279, %v257, 0.0
  %v285 = vsel %vm279, %v258, 0.0
  %v286 = vsel %vm279, %v259, 0.0
  %v287 = vsel %vm280, %v260, 0.0
  %v288 = vsel %vm280, %v261, 0.0
  %v289 = vsel %vm280, %v262, 0.0
  %v290 = vadd.f32 %v281, %v282
  %v291 = vadd.f32 %v290, %v283
  %v292 = vadd.f32 %v291, %v284
  %v293 = vadd.f32 %v292, %v285
  %v294 = vadd.f32 %v293, %v286
  %v295 = vadd.f32 %v294, %v287
  %v296 = vadd.f32 %v295, %v288
  %v297 = vadd.f32 %v296, %v289
  %298 = vadd.xlane.f32.xlu0 %v297
  %v299 = vpop.xlane.xlu0 %298
  %v300 = vrot.slane %v299, 4
  %v301 = vadd.f32 %v299, %v300
  %v302 = vrot.slane %v301, 2
  %v303 = vadd.f32 %v301, %v302
  %v304 = vrot.slane %v303, 1
  %v305 = vadd.f32 %v303, %v304
  %s306 = vtos %v305
  %v307 = vstv %s306
  %308 = vst [vmem:[%s2] sm:$0xff] %v307
  // Predicated region
  $region10: #{js_divergence.1} parent=0 // pred_check
    _
  $region11: #{js_divergence.1} parent=0 // pred_check_branch
    %310 = sbr.rel (0) target = $region13
  $region12: #{js_divergence.1} parent=0 // pred_region
    _
  $region13: #{js_divergence.1} parent=0 // pred_fallthru
    _
  // Predicated region
  $region14: #{js_divergence.1} parent=0 // pred_check
    _
  $region15: #{js_divergence.1} parent=0 // pred_check_branch
    %312 = sbr.rel (0) target = $region17
  $region16: #{js_divergence.1} parent=0 // pred_region
    _
  $region17: #{js_divergence.1} parent=0 // pred_fallthru
    _

</llo_original>
